<compile_context>
chip_gen: v6e
topology: v6e:2x2x1
jax: 0.10.0
libtpu: 0.0.40
codegen_flags: <defaults>
</compile_context>

<pallas_src>
import jax
import jax.numpy as jnp
from jax.experimental import pallas as pl
from jax.experimental.pallas import tpu as pltpu

C_MID = 10  # hidden channels of the 3x3 convs (fused away in the wrapper)


def _make_kernel(H, W):
    """Kernel for one grid step: a block of `bt` batch elements, full H x W."""

    def kernel(r_ref, g_ref, b_ref, wr_ref, wb_ref, beff_ref, o_ref, pad_ref):
        bt = r_ref.shape[0]
        g = g_ref[...]                                     # (bt, H, W)

        # Zero the halo scratch once; only the interior is rewritten per
        # branch, so the 1-pixel zero border ('same' padding) persists.
        pad_ref[...] = jnp.zeros_like(pad_ref)

        def fused_conv3x3(x_ref, w_ref, bias):
            # Effective 3x3 conv (= 3x3[1->10] followed by 1x1[10->1], fused
            # exactly in the wrapper): 9 SMEM-scalar taps.
            pad_ref[:, 1:H + 1, 1:W + 1] = x_ref[...]
            pad = pad_ref[...]                             # (bt, H+2, W+2)
            acc = jnp.zeros((bt, H, W), jnp.float32) + bias
            for kw in range(3):                            # hoisted lane shifts
                col = pad[:, :, kw:kw + W]                 # (bt, H+2, W)
                for kh in range(3):                        # sublane shifts
                    acc = acc + w_ref[3 * kh + kw] * col[:, kh:kh + H, :]
            return acc

        r_out = fused_conv3x3(r_ref, wr_ref, beff_ref[0])
        o_ref[:, 0] = jax.nn.sigmoid(r_out * g + g)        # R branch
        o_ref[:, 1] = g                                    # G passthrough
        b_out = fused_conv3x3(b_ref, wb_ref, beff_ref[1])
        o_ref[:, 2] = jax.nn.sigmoid(b_out * g + g)        # B branch

    return kernel


def _fuse_convs(w3, b3, w1, b1):
    """Fold conv1x1(conv3x3(x)) into one 3x3 kernel + scalar bias (exact).

    Uses elementwise-mul + sum (no dot/einsum) so TPU default matmul
    precision never touches the weights.
    """
    w1v = w1.reshape(C_MID).astype(jnp.float32)                        # (10,)
    w_eff = jnp.sum(w1v[:, None, None] * w3[:, 0].astype(jnp.float32), axis=0)  # (3,3)
    b_eff = jnp.sum(w1v * b3.astype(jnp.float32)) + b1.astype(jnp.float32)[0]
    return w_eff.reshape(9), b_eff


def context_block(img, params, *, batch_block=None):
    """img: (B, H, W, 3) float32 -> (B, 3, H, W) float32 (NCHW, as in PyTorch)."""
    B, H, W, C = img.shape
    assert C == 3

    # Channel split straight from NHWC: cheap strided slices, no full
    # transpose and no HBM-side padding.
    r = img[..., 0].astype(jnp.float32)
    g = img[..., 1].astype(jnp.float32)
    b = img[..., 2].astype(jnp.float32)

    w_eff_r, b_eff_r = _fuse_convs(params["w3r"], params["b3r"],
                                   params["w1r"], params["b1r"])
    w_eff_b, b_eff_b = _fuse_convs(params["w3b"], params["b3b"],
                                   params["w1b"], params["b1b"])
    beff = jnp.stack([b_eff_r, b_eff_b])                               # (2,)

    # Batch elements per grid step: amortize the ~0.35us/step overhead while
    # keeping >= 2 grid steps when possible (two TensorCores on v7x).
    if batch_block is None:
        batch_block = max(1, B // 2)
    bt = max(1, min(int(batch_block), B))
    while B % bt:
        bt -= 1
    # TODO(synk): for very large H*W also tile H (with a 1-row halo) so one
    # block stays within v7x's 64 MiB VMEM.

    smem = pl.BlockSpec(memory_space=pltpu.MemorySpace.SMEM)
    plane = pl.BlockSpec((bt, H, W), lambda i: (i, 0, 0))

    return pl.pallas_call(
        _make_kernel(H, W),
        out_shape=jax.ShapeDtypeStruct((B, 3, H, W), jnp.float32),
        grid=(B // bt,),
        in_specs=[plane, plane, plane, smem, smem, smem],
        out_specs=pl.BlockSpec((bt, 3, H, W), lambda i: (i, 0, 0, 0)),
        scratch_shapes=[pltpu.VMEM((bt, H + 2, W + 2), jnp.float32)],
        compiler_params=pltpu.CompilerParams(
            dimension_semantics=("parallel",),
            vmem_limit_bytes=48 * 1024 * 1024,
        ),
    )(r, g, b, w_eff_r, w_eff_b, beff)


def context_block_ref(img, params):
    """Pure-JAX reference mirroring the PyTorch forward (UNfused convs,
    elementwise fp32 math only, so no TPU matmul-precision slack)."""
    x = jnp.transpose(img, (0, 3, 1, 2)).astype(jnp.float32)   # (B,3,H,W)
    r, g, b = x[:, 0], x[:, 1], x[:, 2]
    B, H, W = g.shape

    def branch(p, w3, b3, w1, b1):
        pp = jnp.pad(p, ((0, 0), (1, 1), (1, 1)))
        w1v = w1.reshape(C_MID)
        out = jnp.zeros((B, H, W), jnp.float32) + b1[0]
        for c in range(C_MID):
            ch = jnp.zeros((B, H, W), jnp.float32) + b3[c]
            for kh in range(3):
                for kw in range(3):
                    ch = ch + w3[c, 0, kh, kw] * pp[:, kh:kh + H, kw:kw + W]
            out = out + w1v[c] * ch
        return jax.nn.sigmoid(out * g + g)

    r_out = branch(r, params["w3r"], params["b3r"], params["w1r"], params["b1r"])
    b_out = branch(b, params["w3b"], params["b3b"], params["w1b"], params["b1b"])
    return jnp.stack([r_out, g, b_out], axis=1)


def init_params(key):
    ks = jax.random.split(key, 8)

    def u(k, shape, fan_in):
        bound = 1.0 / jnp.sqrt(fan_in)
        return jax.random.uniform(k, shape, jnp.float32, -bound, bound)

    return {
        "w3r": u(ks[0], (C_MID, 1, 3, 3), 9.0),
        "b3r": u(ks[1], (C_MID,), 9.0),
        "w1r": u(ks[2], (1, C_MID, 1, 1), float(C_MID)),
        "b1r": u(ks[3], (1,), float(C_MID)),
        "w3b": u(ks[4], (C_MID, 1, 3, 3), 9.0),
        "b3b": u(ks[5], (C_MID,), 9.0),
        "w1b": u(ks[6], (1, C_MID, 1, 1), float(C_MID)),
        "b1b": u(ks[7], (1,), float(C_MID)),
    }


if __name__ == "__main__":
    key = jax.random.PRNGKey(0)
    k_img, k_img2, k_par = jax.random.split(key, 3)
    params = init_params(k_par)

    # Primary (lane-dense) case: W is a multiple of 128.
    B, H, W = 2, 16, 128
    img = jax.random.uniform(k_img, (B, H, W, 3), jnp.float32)
    out = jax.block_until_ready(context_block(img, params))
    assert out.shape == (B, 3, H, W)
    assert jnp.allclose(out, context_block_ref(img, params), atol=1e-5, rtol=1e-5)

    # Small-W case (the original 16x16 test shape) for generality.
    B2, H2, W2 = 2, 16, 16
    img2 = jax.random.uniform(k_img2, (B2, H2, W2, 3), jnp.float32)
    out2 = jax.block_until_ready(context_block(img2, params))
    assert out2.shape == (B2, 3, H2, W2)
    assert jnp.allclose(out2, context_block_ref(img2, params), atol=1e-5, rtol=1e-5)

    print("KERNEL_OK")
</pallas_src>

<mosaic_0001>
module attributes {stable_mosaic.version = 11 : i64} {
  func.func @kernel(%arg0: i32, %arg1: memref<1x16x128xf32, #tpu.memory_space<vmem>>, %arg2: memref<1x16x128xf32, #tpu.memory_space<vmem>>, %arg3: memref<1x16x128xf32, #tpu.memory_space<vmem>>, %arg4: memref<9xf32, #tpu.memory_space<smem>>, %arg5: memref<9xf32, #tpu.memory_space<smem>>, %arg6: memref<2xf32, #tpu.memory_space<smem>>, %arg7: memref<1x3x16x128xf32, #tpu.memory_space<vmem>>, %arg8: memref<1x18x130xf32, #tpu.memory_space<vmem>>) attributes {dimension_semantics = [#tpu.dimension_semantics<parallel>], iteration_bounds = array<i64: 2>, scalar_prefetch = 0 : i64, scratch_operands = 1 : i64, tpu.core_type = #tpu.core_type<tc>, window_params = [{transform_indices = @transform_0, window_bounds = array<i64: 1, 16, 128>}, {transform_indices = @transform_1, window_bounds = array<i64: 1, 16, 128>}, {transform_indices = @transform_2, window_bounds = array<i64: 1, 16, 128>}, {transform_indices = @transform_3, window_bounds = array<i64: 9>}, {transform_indices = @transform_4, window_bounds = array<i64: 9>}, {transform_indices = @transform_5, window_bounds = array<i64: 2>}, {transform_indices = @transform_6, window_bounds = array<i64: 1, 3, 16, 128>}]} {
    %c0 = arith.constant 0 : index
    %c0_0 = arith.constant 0 : index
    %c0_1 = arith.constant 0 : index
    %0 = vector.load %arg2[%c0, %c0_0, %c0_1] : memref<1x16x128xf32, #tpu.memory_space<vmem>>, vector<1x16x128xf32>
    %cst = arith.constant 0.000000e+00 : f32
    %1 = vector.broadcast %cst : f32 to vector<1x18x130xf32>
    %c0_2 = arith.constant 0 : index
    %c0_3 = arith.constant 0 : index
    %c0_4 = arith.constant 0 : index
    %2 = vector.load %arg8[%c0_2, %c0_3, %c0_4] : memref<1x18x130xf32, #tpu.memory_space<vmem>>, vector<1x18x130xf32>
    tpu.vector_store %arg8[%c0_2, %c0_3, %c0_4], %1 {strides = array<i32>} : memref<1x18x130xf32, #tpu.memory_space<vmem>>, vector<1x18x130xf32>,
    %c0_5 = arith.constant 0 : index
    %3 = memref.load %arg6[%c0_5] : memref<2xf32, #tpu.memory_space<smem>>
    %c0_6 = arith.constant 0 : index
    %c0_7 = arith.constant 0 : index
    %c0_8 = arith.constant 0 : index
    %4 = vector.load %arg1[%c0_6, %c0_7, %c0_8] : memref<1x16x128xf32, #tpu.memory_space<vmem>>, vector<1x16x128xf32>
    %c0_9 = arith.constant 0 : index
    %c1 = arith.constant 1 : index
    %c1_10 = arith.constant 1 : index
    %5 = vector.load %arg8[%c0_9, %c1, %c1_10] : memref<1x18x130xf32, #tpu.memory_space<vmem>>, vector<1x16x128xf32>
    tpu.vector_store %arg8[%c0_9, %c1, %c1_10], %4 {strides = array<i32>} : memref<1x18x130xf32, #tpu.memory_space<vmem>>, vector<1x16x128xf32>,
    %c0_11 = arith.constant 0 : index
    %c0_12 = arith.constant 0 : index
    %c0_13 = arith.constant 0 : index
    %6 = vector.load %arg8[%c0_11, %c0_12, %c0_13] : memref<1x18x130xf32, #tpu.memory_space<vmem>>, vector<1x18x130xf32>
    %cst_14 = arith.constant 0.000000e+00 : f32
    %7 = vector.broadcast %cst_14 : f32 to vector<1x16x128xf32>
    %8 = vector.broadcast %3 : f32 to vector<1x16x128xf32>
    %9 = arith.addf %7, %8 : vector<1x16x128xf32>
    %10 = vector.extract_strided_slice %6 {offsets = [0, 0, 0], sizes = [1, 18, 128], strides = [1, 1, 1]} : vector<1x18x130xf32> to vector<1x18x128xf32>
    %c0_15 = arith.constant 0 : index
    %11 = memref.load %arg4[%c0_15] : memref<9xf32, #tpu.memory_space<smem>>
    %12 = vector.extract_strided_slice %10 {offsets = [0, 0, 0], sizes = [1, 16, 128], strides = [1, 1, 1]} : vector<1x18x128xf32> to vector<1x16x128xf32>
    %13 = vector.broadcast %11 : f32 to vector<1x16x128xf32>
    %14 = arith.mulf %13, %12 : vector<1x16x128xf32>
    %15 = arith.addf %9, %14 : vector<1x16x128xf32>
    %c3 = arith.constant 3 : index
    %16 = memref.load %arg4[%c3] : memref<9xf32, #tpu.memory_space<smem>>
    %17 = vector.extract_strided_slice %10 {offsets = [0, 1, 0], sizes = [1, 16, 128], strides = [1, 1, 1]} : vector<1x18x128xf32> to vector<1x16x128xf32>
    %18 = vector.broadcast %16 : f32 to vector<1x16x128xf32>
    %19 = arith.mulf %18, %17 : vector<1x16x128xf32>
    %20 = arith.addf %15, %19 : vector<1x16x128xf32>
    %c6 = arith.constant 6 : index
    %21 = memref.load %arg4[%c6] : memref<9xf32, #tpu.memory_space<smem>>
    %22 = vector.extract_strided_slice %10 {offsets = [0, 2, 0], sizes = [1, 16, 128], strides = [1, 1, 1]} : vector<1x18x128xf32> to vector<1x16x128xf32>
    %23 = vector.broadcast %21 : f32 to vector<1x16x128xf32>
    %24 = arith.mulf %23, %22 : vector<1x16x128xf32>
    %25 = arith.addf %20, %24 : vector<1x16x128xf32>
    %26 = vector.extract_strided_slice %6 {offsets = [0, 0, 1], sizes = [1, 18, 128], strides = [1, 1, 1]} : vector<1x18x130xf32> to vector<1x18x128xf32>
    %c1_16 = arith.constant 1 : index
    %27 = memref.load %arg4[%c1_16] : memref<9xf32, #tpu.memory_space<smem>>
    %28 = vector.extract_strided_slice %26 {offsets = [0, 0, 0], sizes = [1, 16, 128], strides = [1, 1, 1]} : vector<1x18x128xf32> to vector<1x16x128xf32>
    %29 = vector.broadcast %27 : f32 to vector<1x16x128xf32>
    %30 = arith.mulf %29, %28 : vector<1x16x128xf32>
    %31 = arith.addf %25, %30 : vector<1x16x128xf32>
    %c4 = arith.constant 4 : index
    %32 = memref.load %arg4[%c4] : memref<9xf32, #tpu.memory_space<smem>>
    %33 = vector.extract_strided_slice %26 {offsets = [0, 1, 0], sizes = [1, 16, 128], strides = [1, 1, 1]} : vector<1x18x128xf32> to vector<1x16x128xf32>
    %34 = vector.broadcast %32 : f32 to vector<1x16x128xf32>
    %35 = arith.mulf %34, %33 : vector<1x16x128xf32>
    %36 = arith.addf %31, %35 : vector<1x16x128xf32>
    %c7 = arith.constant 7 : index
    %37 = memref.load %arg4[%c7] : memref<9xf32, #tpu.memory_space<smem>>
    %38 = vector.extract_strided_slice %26 {offsets = [0, 2, 0], sizes = [1, 16, 128], strides = [1, 1, 1]} : vector<1x18x128xf32> to vector<1x16x128xf32>
    %39 = vector.broadcast %37 : f32 to vector<1x16x128xf32>
    %40 = arith.mulf %39, %38 : vector<1x16x128xf32>
    %41 = arith.addf %36, %40 : vector<1x16x128xf32>
    %42 = vector.extract_strided_slice %6 {offsets = [0, 0, 2], sizes = [1, 18, 128], strides = [1, 1, 1]} : vector<1x18x130xf32> to vector<1x18x128xf32>
    %c2 = arith.constant 2 : index
    %43 = memref.load %arg4[%c2] : memref<9xf32, #tpu.memory_space<smem>>
    %44 = vector.extract_strided_slice %42 {offsets = [0, 0, 0], sizes = [1, 16, 128], strides = [1, 1, 1]} : vector<1x18x128xf32> to vector<1x16x128xf32>
    %45 = vector.broadcast %43 : f32 to vector<1x16x128xf32>
    %46 = arith.mulf %45, %44 : vector<1x16x128xf32>
    %47 = arith.addf %41, %46 : vector<1x16x128xf32>
    %c5 = arith.constant 5 : index
    %48 = memref.load %arg4[%c5] : memref<9xf32, #tpu.memory_space<smem>>
    %49 = vector.extract_strided_slice %42 {offsets = [0, 1, 0], sizes = [1, 16, 128], strides = [1, 1, 1]} : vector<1x18x128xf32> to vector<1x16x128xf32>
    %50 = vector.broadcast %48 : f32 to vector<1x16x128xf32>
    %51 = arith.mulf %50, %49 : vector<1x16x128xf32>
    %52 = arith.addf %47, %51 : vector<1x16x128xf32>
    %c8 = arith.constant 8 : index
    %53 = memref.load %arg4[%c8] : memref<9xf32, #tpu.memory_space<smem>>
    %54 = vector.extract_strided_slice %42 {offsets = [0, 2, 0], sizes = [1, 16, 128], strides = [1, 1, 1]} : vector<1x18x128xf32> to vector<1x16x128xf32>
    %55 = vector.broadcast %53 : f32 to vector<1x16x128xf32>
    %56 = arith.mulf %55, %54 : vector<1x16x128xf32>
    %57 = arith.addf %52, %56 : vector<1x16x128xf32>
    %58 = arith.mulf %57, %0 : vector<1x16x128xf32>
    %59 = arith.addf %58, %0 : vector<1x16x128xf32>
    %60 = arith.negf %59 : vector<1x16x128xf32>
    %61 = math.exp %60 : vector<1x16x128xf32>
    %cst_17 = arith.constant 1.000000e+00 : f32
    %62 = vector.broadcast %cst_17 : f32 to vector<1x16x128xf32>
    %63 = arith.addf %62, %61 : vector<1x16x128xf32>
    %64 = arith.divf %62, %63 : vector<1x16x128xf32>
    %c0_18 = arith.constant 0 : index
    %c0_19 = arith.constant 0 : index
    %c0_20 = arith.constant 0 : index
    %c0_21 = arith.constant 0 : index
    %65 = vector.load %arg7[%c0_18, %c0_19, %c0_20, %c0_21] : memref<1x3x16x128xf32, #tpu.memory_space<vmem>>, vector<1x1x16x128xf32>
    %66 = vector.shape_cast %65 : vector<1x1x16x128xf32> to vector<1x16x128xf32>
    %67 = vector.shape_cast %64 : vector<1x16x128xf32> to vector<1x1x16x128xf32>
    tpu.vector_store %arg7[%c0_18, %c0_19, %c0_20, %c0_21], %67 {strides = array<i32>} : memref<1x3x16x128xf32, #tpu.memory_space<vmem>>, vector<1x1x16x128xf32>,
    %c0_22 = arith.constant 0 : index
    %c1_23 = arith.constant 1 : index
    %c0_24 = arith.constant 0 : index
    %c0_25 = arith.constant 0 : index
    %68 = vector.load %arg7[%c0_22, %c1_23, %c0_24, %c0_25] : memref<1x3x16x128xf32, #tpu.memory_space<vmem>>, vector<1x1x16x128xf32>
    %69 = vector.shape_cast %68 : vector<1x1x16x128xf32> to vector<1x16x128xf32>
    %70 = vector.shape_cast %0 : vector<1x16x128xf32> to vector<1x1x16x128xf32>
    tpu.vector_store %arg7[%c0_22, %c1_23, %c0_24, %c0_25], %70 {strides = array<i32>} : memref<1x3x16x128xf32, #tpu.memory_space<vmem>>, vector<1x1x16x128xf32>,
    %c1_26 = arith.constant 1 : index
    %71 = memref.load %arg6[%c1_26] : memref<2xf32, #tpu.memory_space<smem>>
    %c0_27 = arith.constant 0 : index
    %c0_28 = arith.constant 0 : index
    %c0_29 = arith.constant 0 : index
    %72 = vector.load %arg3[%c0_27, %c0_28, %c0_29] : memref<1x16x128xf32, #tpu.memory_space<vmem>>, vector<1x16x128xf32>
    %c0_30 = arith.constant 0 : index
    %c1_31 = arith.constant 1 : index
    %c1_32 = arith.constant 1 : index
    %73 = vector.load %arg8[%c0_30, %c1_31, %c1_32] : memref<1x18x130xf32, #tpu.memory_space<vmem>>, vector<1x16x128xf32>
    tpu.vector_store %arg8[%c0_30, %c1_31, %c1_32], %72 {strides = array<i32>} : memref<1x18x130xf32, #tpu.memory_space<vmem>>, vector<1x16x128xf32>,
    %c0_33 = arith.constant 0 : index
    %c0_34 = arith.constant 0 : index
    %c0_35 = arith.constant 0 : index
    %74 = vector.load %arg8[%c0_33, %c0_34, %c0_35] : memref<1x18x130xf32, #tpu.memory_space<vmem>>, vector<1x18x130xf32>
    %cst_36 = arith.constant 0.000000e+00 : f32
    %75 = vector.broadcast %cst_36 : f32 to vector<1x16x128xf32>
    %76 = vector.broadcast %71 : f32 to vector<1x16x128xf32>
    %77 = arith.addf %75, %76 : vector<1x16x128xf32>
    %78 = vector.extract_strided_slice %74 {offsets = [0, 0, 0], sizes = [1, 18, 128], strides = [1, 1, 1]} : vector<1x18x130xf32> to vector<1x18x128xf32>
    %c0_37 = arith.constant 0 : index
    %79 = memref.load %arg5[%c0_37] : memref<9xf32, #tpu.memory_space<smem>>
    %80 = vector.extract_strided_slice %78 {offsets = [0, 0, 0], sizes = [1, 16, 128], strides = [1, 1, 1]} : vector<1x18x128xf32> to vector<1x16x128xf32>
    %81 = vector.broadcast %79 : f32 to vector<1x16x128xf32>
    %82 = arith.mulf %81, %80 : vector<1x16x128xf32>
    %83 = arith.addf %77, %82 : vector<1x16x128xf32>
    %c3_38 = arith.constant 3 : index
    %84 = memref.load %arg5[%c3_38] : memref<9xf32, #tpu.memory_space<smem>>
    %85 = vector.extract_strided_slice %78 {offsets = [0, 1, 0], sizes = [1, 16, 128], strides = [1, 1, 1]} : vector<1x18x128xf32> to vector<1x16x128xf32>
    %86 = vector.broadcast %84 : f32 to vector<1x16x128xf32>
    %87 = arith.mulf %86, %85 : vector<1x16x128xf32>
    %88 = arith.addf %83, %87 : vector<1x16x128xf32>
    %c6_39 = arith.constant 6 : index
    %89 = memref.load %arg5[%c6_39] : memref<9xf32, #tpu.memory_space<smem>>
    %90 = vector.extract_strided_slice %78 {offsets = [0, 2, 0], sizes = [1, 16, 128], strides = [1, 1, 1]} : vector<1x18x128xf32> to vector<1x16x128xf32>
    %91 = vector.broadcast %89 : f32 to vector<1x16x128xf32>
    %92 = arith.mulf %91, %90 : vector<1x16x128xf32>
    %93 = arith.addf %88, %92 : vector<1x16x128xf32>
    %94 = vector.extract_strided_slice %74 {offsets = [0, 0, 1], sizes = [1, 18, 128], strides = [1, 1, 1]} : vector<1x18x130xf32> to vector<1x18x128xf32>
    %c1_40 = arith.constant 1 : index
    %95 = memref.load %arg5[%c1_40] : memref<9xf32, #tpu.memory_space<smem>>
    %96 = vector.extract_strided_slice %94 {offsets = [0, 0, 0], sizes = [1, 16, 128], strides = [1, 1, 1]} : vector<1x18x128xf32> to vector<1x16x128xf32>
    %97 = vector.broadcast %95 : f32 to vector<1x16x128xf32>
    %98 = arith.mulf %97, %96 : vector<1x16x128xf32>
    %99 = arith.addf %93, %98 : vector<1x16x128xf32>
    %c4_41 = arith.constant 4 : index
    %100 = memref.load %arg5[%c4_41] : memref<9xf32, #tpu.memory_space<smem>>
    %101 = vector.extract_strided_slice %94 {offsets = [0, 1, 0], sizes = [1, 16, 128], strides = [1, 1, 1]} : vector<1x18x128xf32> to vector<1x16x128xf32>
    %102 = vector.broadcast %100 : f32 to vector<1x16x128xf32>
    %103 = arith.mulf %102, %101 : vector<1x16x128xf32>
    %104 = arith.addf %99, %103 : vector<1x16x128xf32>
    %c7_42 = arith.constant 7 : index
    %105 = memref.load %arg5[%c7_42] : memref<9xf32, #tpu.memory_space<smem>>
    %106 = vector.extract_strided_slice %94 {offsets = [0, 2, 0], sizes = [1, 16, 128], strides = [1, 1, 1]} : vector<1x18x128xf32> to vector<1x16x128xf32>
    %107 = vector.broadcast %105 : f32 to vector<1x16x128xf32>
    %108 = arith.mulf %107, %106 : vector<1x16x128xf32>
    %109 = arith.addf %104, %108 : vector<1x16x128xf32>
    %110 = vector.extract_strided_slice %74 {offsets = [0, 0, 2], sizes = [1, 18, 128], strides = [1, 1, 1]} : vector<1x18x130xf32> to vector<1x18x128xf32>
    %c2_43 = arith.constant 2 : index
    %111 = memref.load %arg5[%c2_43] : memref<9xf32, #tpu.memory_space<smem>>
    %112 = vector.extract_strided_slice %110 {offsets = [0, 0, 0], sizes = [1, 16, 128], strides = [1, 1, 1]} : vector<1x18x128xf32> to vector<1x16x128xf32>
    %113 = vector.broadcast %111 : f32 to vector<1x16x128xf32>
    %114 = arith.mulf %113, %112 : vector<1x16x128xf32>
    %115 = arith.addf %109, %114 : vector<1x16x128xf32>
    %c5_44 = arith.constant 5 : index
    %116 = memref.load %arg5[%c5_44] : memref<9xf32, #tpu.memory_space<smem>>
    %117 = vector.extract_strided_slice %110 {offsets = [0, 1, 0], sizes = [1, 16, 128], strides = [1, 1, 1]} : vector<1x18x128xf32> to vector<1x16x128xf32>
    %118 = vector.broadcast %116 : f32 to vector<1x16x128xf32>
    %119 = arith.mulf %118, %117 : vector<1x16x128xf32>
    %120 = arith.addf %115, %119 : vector<1x16x128xf32>
    %c8_45 = arith.constant 8 : index
    %121 = memref.load %arg5[%c8_45] : memref<9xf32, #tpu.memory_space<smem>>
    %122 = vector.extract_strided_slice %110 {offsets = [0, 2, 0], sizes = [1, 16, 128], strides = [1, 1, 1]} : vector<1x18x128xf32> to vector<1x16x128xf32>
    %123 = vector.broadcast %121 : f32 to vector<1x16x128xf32>
    %124 = arith.mulf %123, %122 : vector<1x16x128xf32>
    %125 = arith.addf %120, %124 : vector<1x16x128xf32>
    %126 = arith.mulf %125, %0 : vector<1x16x128xf32>
    %127 = arith.addf %126, %0 : vector<1x16x128xf32>
    %128 = arith.negf %127 : vector<1x16x128xf32>
    %129 = math.exp %128 : vector<1x16x128xf32>
    %cst_46 = arith.constant 1.000000e+00 : f32
    %130 = vector.broadcast %cst_46 : f32 to vector<1x16x128xf32>
    %131 = arith.addf %130, %129 : vector<1x16x128xf32>
    %132 = arith.divf %130, %131 : vector<1x16x128xf32>
    %c0_47 = arith.constant 0 : index
    %c2_48 = arith.constant 2 : index
    %c0_49 = arith.constant 0 : index
    %c0_50 = arith.constant 0 : index
    %133 = vector.load %arg7[%c0_47, %c2_48, %c0_49, %c0_50] : memref<1x3x16x128xf32, #tpu.memory_space<vmem>>, vector<1x1x16x128xf32>
    %134 = vector.shape_cast %133 : vector<1x1x16x128xf32> to vector<1x16x128xf32>
    %135 = vector.shape_cast %132 : vector<1x16x128xf32> to vector<1x1x16x128xf32>
    tpu.vector_store %arg7[%c0_47, %c2_48, %c0_49, %c0_50], %135 {strides = array<i32>} : memref<1x3x16x128xf32, #tpu.memory_space<vmem>>, vector<1x1x16x128xf32>,
    return
  }
  func.func @transform_0(%arg0: i32) -> (i32, i32, i32) {
    %c0_i32 = arith.constant 0 : i32
    %c0_i32_0 = arith.constant 0 : i32
    %c0_i32_1 = arith.constant 0 : i32
    return %arg0, %c0_i32, %c0_i32_0 : i32, i32, i32
  }
  func.func @transform_1(%arg0: i32) -> (i32, i32, i32) {
    %c0_i32 = arith.constant 0 : i32
    %c0_i32_0 = arith.constant 0 : i32
    %c0_i32_1 = arith.constant 0 : i32
    return %arg0, %c0_i32, %c0_i32_0 : i32, i32, i32
  }
  func.func @transform_2(%arg0: i32) -> (i32, i32, i32) {
    %c0_i32 = arith.constant 0 : i32
    %c0_i32_0 = arith.constant 0 : i32
    %c0_i32_1 = arith.constant 0 : i32
    return %arg0, %c0_i32, %c0_i32_0 : i32, i32, i32
  }
  func.func @transform_3(%arg0: i32) -> i32 {
    %c0_i32 = arith.constant 0 : i32
    %c0_i32_0 = arith.constant 0 : i32
    return %c0_i32 : i32
  }
  func.func @transform_4(%arg0: i32) -> i32 {
    %c0_i32 = arith.constant 0 : i32
    %c0_i32_0 = arith.constant 0 : i32
    return %c0_i32 : i32
  }
  func.func @transform_5(%arg0: i32) -> i32 {
    %c0_i32 = arith.constant 0 : i32
    %c0_i32_0 = arith.constant 0 : i32
    return %c0_i32 : i32
  }
  func.func @transform_6(%arg0: i32) -> (i32, i32, i32, i32) {
    %c0_i32 = arith.constant 0 : i32
    %c0_i32_0 = arith.constant 0 : i32
    %c0_i32_1 = arith.constant 0 : i32
    %c0_i32_2 = arith.constant 0 : i32
    return %arg0, %c0_i32, %c0_i32_0, %c0_i32_1 : i32, i32, i32, i32
  }
}

</mosaic_0001>

<llo_original>
// kernel: tpu_custom_call.1
$region0: #{tpu_custom_call.1}
  #allocation0 [shape = 'u32[]', space=smem, size = 0x4, offset = 0x4, fixed_abs, tag = 'smem constant byte address 0x4 - core index']
  #allocation1 [shape = 'u32[144,128]{1,0:T(1,128)}', space=vmem, size = 0x12000, scoped, tag = 'internal scratch']
  #allocation2 [shape = 'f32[1,18,130]{2,1,0:T(8,128)}', space=vmem, size = 0x6000, scoped, tag = 'scratch operand']
  %s0 = inlined_call_operand.hbm [shape: f32[2,16,128], index: 0, kind: input, shape index: {}]
  %s1 = inlined_call_operand.hbm [shape: f32[2,16,128], index: 1, kind: input, shape index: {}]
  %s2 = inlined_call_operand.hbm [shape: f32[2,16,128], index: 2, kind: input, shape index: {}]
  %s3 = inlined_call_operand.vmem [shape: f32[9], index: 3, kind: input, shape index: {}]
  %s4 = inlined_call_operand.vmem [shape: f32[9], index: 4, kind: input, shape index: {}]
  %s5 = inlined_call_operand.vmem [shape: f32[2], index: 5, kind: input, shape index: {}]
  %s6 = inlined_call_operand.hbm [shape: f32[2,3,16,128], index: 6, kind: output, shape index: {}]
  %s7 = sld [smem:[#allocation0]]
  $region81: #{tpu_custom_call.1} parent=0
    _
  %s9 = ssub.s32 1, %s7
  %s10 = scalar_select 0, %s9, %s7
  $region1: #{tpu_custom_call.1} parent=0
    #allocation3 [shape = 'u8[16384]{0}', space=vmem, size = 0x4000, scoped, tag = 'input window, operand 0']
    #allocation4 [shape = 's32[2]{0}', space=sflag, size = 0x8, scoped, tag = 'scoped memory for tpu_custom_call.1']
    #allocation5 [shape = 's32[2]{0}', space=sflag, size = 0x8, scoped, tag = 'scoped memory for tpu_custom_call.1']
    #allocation6 [shape = 's32[2]{0}', space=sflag, size = 0x8, scoped, tag = 'scoped memory for tpu_custom_call.1']
    #allocation7 [shape = 'u8[16384]{0}', space=vmem, size = 0x4000, scoped, tag = 'input window, operand 1']
    #allocation8 [shape = 's32[2]{0}', space=sflag, size = 0x8, scoped, tag = 'scoped memory for tpu_custom_call.1']
    #allocation9 [shape = 'u8[16384]{0}', space=vmem, size = 0x4000, scoped, tag = 'input window, operand 2']
    #allocation10 [shape = 'u8[512]{0}', space=smem, size = 0x200, scoped, tag = 'input window, operand 3, single buffered']
    #allocation11 [shape = 'u8[512]{0}', space=smem, size = 0x200, scoped, tag = 'input window, operand 4, single buffered']
    #allocation12 [shape = 's32[1]{0}', space=sflag, size = 0x4, scoped, tag = 'scoped memory for tpu_custom_call.1']
    #allocation13 [shape = 'u8[512]{0}', space=smem, size = 0x200, scoped, tag = 'input window, operand 5, single buffered']
    #allocation14 [shape = 'u8[49152]{0}', space=vmem, size = 0xc000, scoped, tag = 'output window, operand 0']
    %11 = vsyncpa [#allocation4], 0
    %s12 = scalar_lea.sflag [#allocation4], 1
    %13 = vsyncpa %s12, 0
    %14 = vsyncpa [#allocation8], 0
    %s15 = scalar_lea.sflag [#allocation8], 1
    %16 = vsyncpa %s15, 0
    %17 = vsyncpa [#allocation6], 0
    %18 = vsyncpa [#allocation12], 0
    %19 = vsyncpa [#allocation5], 0
    %s20 = scalar_lea.sflag [#allocation5], 1
    %21 = vsyncpa %s20, 0
    loop: start=0, step=1, limit=4
    $region2: #{tpu_custom_call.1} parent=1 // loop_pre_header
      _
    $region3: #{tpu_custom_call.1} parent=1 // loop_header
      %s23 = sphi 0, %s27
      %p24 = scmp.ge.s32.totalorder %s23, 4
      %s33 = sphi 0, %s35
      %s36 = sphi 0, %s33
      %s37 = sphi 0, %s36
      %s53 = sphi 0, %s37
      %s59 = sphi 0, %s61
      %s62 = sphi 0, %s59
      %s63 = sphi 0, %s62
      %s79 = sphi 0, %s63
      %s85 = sphi 0, %s87
      %s88 = sphi 0, %s85
      %s89 = sphi 0, %s88
      %s105 = sphi 0, %s89
      %s109 = sphi 0, %s109
      %s111 = sphi 0, %s109
      %s112 = sphi 0, %s111
      %s126 = sphi 0, %s112
      %s130 = sphi 0, %s130
      %s132 = sphi 0, %s130
      %s133 = sphi 0, %s132
      %s147 = sphi 0, %s133
      %s151 = sphi 0, %s151
      %s153 = sphi 0, %s151
      %s154 = sphi 0, %s153
      %s168 = sphi 0, %s154
      %s174 = sphi 0, %s176
      %s177 = sphi 0, %s174
      %s178 = sphi 0, %s177
      %s194 = sphi 0, %s178
    $region4: #{tpu_custom_call.1} parent=1 // loop_header_branch
      %26 = sbr.rel (%p24) target = $region8
    $region5: #{tpu_custom_call.1} parent=1 // loop_body
      %s28 = ssub.s32 %s23, 1
      %s29 = ssub.s32 %s23, 2
      %s30 = sadd.s32 %s23, 1
      %s31 = ssub.s32 %s23, %s30
      %p32 = scmp.eq.s32.totalorder %s31, 0
      %s34 = sadd.s32 %s33, 1
      %s35 = scalar_select %p32, %s33, %s34
      %p38 = pneg %p32
      %p39 = scmp.eq.s32.totalorder %s23, 1
      %p40 = por %p38, %p39
      %p41 = scmp.ne.s32.totalorder %s33, %s36
      %p42 = scmp.eq.s32.totalorder %s23, 0
      %p43 = por %p41, %p42
      %p44 = scmp.ne.s32.totalorder %s33, %s36
      %p45 = scmp.eq.s32.totalorder %s28, 1
      %p46 = por %p44, %p45
      %p47 = scmp.ne.s32.totalorder %s36, %s37
      %p48 = scmp.eq.s32.totalorder %s28, 0
      %p49 = por %p47, %p48
      %p50 = scmp.ne.s32.totalorder %s36, %s37
      %p51 = scmp.eq.s32.totalorder %s29, 1
      %p52 = por %p50, %p51
      %p54 = scmp.ne.s32.totalorder %s37, %s53
      %p55 = scmp.eq.s32.totalorder %s29, 0
      %p56 = por %p54, %p55
      %s57 = ssub.s32 %s23, %s30
      %p58 = scmp.eq.s32.totalorder %s57, 0
      %s60 = sadd.s32 %s59, 1
      %s61 = scalar_select %p58, %s59, %s60
      %p64 = pneg %p58
      %p65 = scmp.eq.s32.totalorder %s23, 1
      %p66 = por %p64, %p65
      %p67 = scmp.ne.s32.totalorder %s59, %s62
      %p68 = scmp.eq.s32.totalorder %s23, 0
      %p69 = por %p67, %p68
      %p70 = scmp.ne.s32.totalorder %s59, %s62
      %p71 = scmp.eq.s32.totalorder %s28, 1
      %p72 = por %p70, %p71
      %p73 = scmp.ne.s32.totalorder %s62, %s63
      %p74 = scmp.eq.s32.totalorder %s28, 0
      %p75 = por %p73, %p74
      %p76 = scmp.ne.s32.totalorder %s62, %s63
      %p77 = scmp.eq.s32.totalorder %s29, 1
      %p78 = por %p76, %p77
      %p80 = scmp.ne.s32.totalorder %s63, %s79
      %p81 = scmp.eq.s32.totalorder %s29, 0
      %p82 = por %p80, %p81
      %s83 = ssub.s32 %s23, %s30
      %p84 = scmp.eq.s32.totalorder %s83, 0
      %s86 = sadd.s32 %s85, 1
      %s87 = scalar_select %p84, %s85, %s86
      %p90 = pneg %p84
      %p91 = scmp.eq.s32.totalorder %s23, 1
      %p92 = por %p90, %p91
      %p93 = scmp.ne.s32.totalorder %s85, %s88
      %p94 = scmp.eq.s32.totalorder %s23, 0
      %p95 = por %p93, %p94
      %p96 = scmp.ne.s32.totalorder %s85, %s88
      %p97 = scmp.eq.s32.totalorder %s28, 1
      %p98 = por %p96, %p97
      %p99 = scmp.ne.s32.totalorder %s88, %s89
      %p100 = scmp.eq.s32.totalorder %s28, 0
      %p101 = por %p99, %p100
      %p102 = scmp.ne.s32.totalorder %s88, %s89
      %p103 = scmp.eq.s32.totalorder %s29, 1
      %p104 = por %p102, %p103
      %p106 = scmp.ne.s32.totalorder %s89, %s105
      %p107 = scmp.eq.s32.totalorder %s29, 0
      %p108 = por %p106, %p107
      %s110 = sadd.s32 %s109, 1
      %p113 = scmp.eq.s32.totalorder %s23, 1
      %p114 = scmp.ne.s32.totalorder %s109, %s111
      %p115 = scmp.eq.s32.totalorder %s23, 0
      %p116 = por %p114, %p115
      %p117 = scmp.ne.s32.totalorder %s109, %s111
      %p118 = scmp.eq.s32.totalorder %s28, 1
      %p119 = por %p117, %p118
      %p120 = scmp.ne.s32.totalorder %s111, %s112
      %p121 = scmp.eq.s32.totalorder %s28, 0
      %p122 = por %p120, %p121
      %p123 = scmp.ne.s32.totalorder %s111, %s112
      %p124 = scmp.eq.s32.totalorder %s29, 1
      %p125 = por %p123, %p124
      %p127 = scmp.ne.s32.totalorder %s112, %s126
      %p128 = scmp.eq.s32.totalorder %s29, 0
      %p129 = por %p127, %p128
      %s131 = sadd.s32 %s130, 1
      %p134 = scmp.eq.s32.totalorder %s23, 1
      %p135 = scmp.ne.s32.totalorder %s130, %s132
      %p136 = scmp.eq.s32.totalorder %s23, 0
      %p137 = por %p135, %p136
      %p138 = scmp.ne.s32.totalorder %s130, %s132
      %p139 = scmp.eq.s32.totalorder %s28, 1
      %p140 = por %p138, %p139
      %p141 = scmp.ne.s32.totalorder %s132, %s133
      %p142 = scmp.eq.s32.totalorder %s28, 0
      %p143 = por %p141, %p142
      %p144 = scmp.ne.s32.totalorder %s132, %s133
      %p145 = scmp.eq.s32.totalorder %s29, 1
      %p146 = por %p144, %p145
      %p148 = scmp.ne.s32.totalorder %s133, %s147
      %p149 = scmp.eq.s32.totalorder %s29, 0
      %p150 = por %p148, %p149
      %s152 = sadd.s32 %s151, 1
      %p155 = scmp.eq.s32.totalorder %s23, 1
      %p156 = scmp.ne.s32.totalorder %s151, %s153
      %p157 = scmp.eq.s32.totalorder %s23, 0
      %p158 = por %p156, %p157
      %p159 = scmp.ne.s32.totalorder %s151, %s153
      %p160 = scmp.eq.s32.totalorder %s28, 1
      %p161 = por %p159, %p160
      %p162 = scmp.ne.s32.totalorder %s153, %s154
      %p163 = scmp.eq.s32.totalorder %s28, 0
      %p164 = por %p162, %p163
      %p165 = scmp.ne.s32.totalorder %s153, %s154
      %p166 = scmp.eq.s32.totalorder %s29, 1
      %p167 = por %p165, %p166
      %p169 = scmp.ne.s32.totalorder %s154, %s168
      %p170 = scmp.eq.s32.totalorder %s29, 0
      %p171 = por %p169, %p170
      %s172 = ssub.s32 %s23, %s30
      %p173 = scmp.eq.s32.totalorder %s172, 0
      %s175 = sadd.s32 %s174, 1
      %s176 = scalar_select %p173, %s174, %s175
      %p179 = pneg %p173
      %p180 = scmp.eq.s32.totalorder %s23, 1
      %p181 = por %p179, %p180
      %p182 = scmp.ne.s32.totalorder %s174, %s177
      %p183 = scmp.eq.s32.totalorder %s23, 0
      %p184 = por %p182, %p183
      %p185 = scmp.ne.s32.totalorder %s174, %s177
      %p186 = scmp.eq.s32.totalorder %s28, 1
      %p187 = por %p185, %p186
      %p188 = scmp.ne.s32.totalorder %s177, %s178
      %p189 = scmp.eq.s32.totalorder %s28, 0
      %p190 = por %p188, %p189
      %p191 = scmp.ne.s32.totalorder %s177, %s178
      %p192 = scmp.eq.s32.totalorder %s29, 1
      %p193 = por %p191, %p192
      %p195 = scmp.ne.s32.totalorder %s178, %s194
      %p196 = scmp.eq.s32.totalorder %s29, 0
      %p197 = por %p195, %p196
      %p198 = scmp.le.s32.totalorder 1, %s23
      %p199 = scmp.lt.s32.totalorder %s23, 3
      %p200 = pnand %p198, %p199
      %p201 = pneg %p200
      // Predicated region
      $region9: #{tpu_custom_call.1} parent=5 // pred_check
        _
      $region10: #{tpu_custom_call.1} parent=5 // pred_check_branch
        %203 = sbr.rel (%p200) target = $region12
      $region11: #{tpu_custom_call.1} parent=5 // pred_region
        %s204 = ssub.s32 %s23, 1
        // Predicated region
        $region13: #{tpu_custom_call.1} parent=11 // pred_check
          %p205 = pneg %p122
        $region14: #{tpu_custom_call.1} parent=11 // pred_check_branch
          %207 = sbr.rel (%p205) target = $region16
        $region15: #{tpu_custom_call.1} parent=11 // pred_region
          %s209 = ssub.s32 16, 16
          %210 = vsyncadd [#allocation6], %s209
          %s212 = sshll.u32 %s3, 4
          %s213 = int_to_ptr.vmem [resolvable:$true] %s212
          %215 = dma.vmem_to_smem %s213, 16, [#allocation10], [#allocation6]
        $region16: #{tpu_custom_call.1} parent=11 // pred_fallthru
          _
        // Predicated region
        $region17: #{tpu_custom_call.1} parent=11 // pred_check
          %p216 = pneg %p143
        $region18: #{tpu_custom_call.1} parent=11 // pred_check_branch
          %218 = sbr.rel (%p216) target = $region20
        $region19: #{tpu_custom_call.1} parent=11 // pred_region
          %s220 = ssub.s32 16, 16
          %221 = vsyncadd [#allocation12], %s220
          %s223 = sshll.u32 %s4, 4
          %s224 = int_to_ptr.vmem [resolvable:$true] %s223
          %226 = dma.vmem_to_smem %s224, 16, [#allocation11], [#allocation12]
        $region20: #{tpu_custom_call.1} parent=11 // pred_fallthru
          _
        // Predicated region
        $region21: #{tpu_custom_call.1} parent=11 // pred_check
          %p227 = pneg %p164
        $region22: #{tpu_custom_call.1} parent=11 // pred_check_branch
          %229 = sbr.rel (%p227) target = $region24
        $region23: #{tpu_custom_call.1} parent=11 // pred_region
          %s231 = ssub.s32 16, 16
          %232 = vsyncadd [#allocation12], %s231
          %s234 = sshll.u32 %s5, 4
          %s235 = int_to_ptr.vmem [resolvable:$true] %s234
          %237 = dma.vmem_to_smem %s235, 16, [#allocation13], [#allocation12]
        $region24: #{tpu_custom_call.1} parent=11 // pred_fallthru
          _
      $region12: #{tpu_custom_call.1} parent=5 // pred_fallthru
        _
      %p238 = scmp.lt.s32.totalorder %s23, 2
      // Predicated region
      $region25: #{tpu_custom_call.1} parent=5 // pred_check
        %p239 = pneg %p238
      $region26: #{tpu_custom_call.1} parent=5 // pred_check_branch
        %241 = sbr.rel (%p239) target = $region28
      $region27: #{tpu_custom_call.1} parent=5 // pred_region
        // Predicated region
        $region29: #{tpu_custom_call.1} parent=27 // pred_check
          %p242 = pneg %p43
        $region30: #{tpu_custom_call.1} parent=27 // pred_check_branch
          %244 = sbr.rel (%p242) target = $region32
        $region31: #{tpu_custom_call.1} parent=27 // pred_region
          %s245 = sand.u32 %s33, 1
          %s246 = scalar_lea.sflag [#allocation4], %s245
          %s247 = sand.u32 %s33, 1
          %s248 = smul.addr %s247, 16
          %s249 = scalar_lea.vmem [#allocation3], %s248
          %s251 = ssub.s32 256, 256
          %252 = vsyncadd %s246, %s251
          %s253 = smul.addr %s23, 2
          %s254 = smul.addr %s253, 128
          %s255 = scalar_lea.hbm %s0, %s254
          %s256 = sshll.u32 %s249, 4
          %s257 = int_to_ptr.vmem [resolvable:$true] %s256
          %262 = dma.hbm_to_vmem [thread:$0]  %s255, 256, %s257, %s246, 128, 128, 8
        $region32: #{tpu_custom_call.1} parent=27 // pred_fallthru
          _
        // Predicated region
        $region33: #{tpu_custom_call.1} parent=27 // pred_check
          %p263 = pneg %p69
        $region34: #{tpu_custom_call.1} parent=27 // pred_check_branch
          %265 = sbr.rel (%p263) target = $region36
        $region35: #{tpu_custom_call.1} parent=27 // pred_region
          %s266 = sand.u32 %s23, 1
          %s267 = scalar_lea.sflag [#allocation8], %s266
          %s268 = sand.u32 %s59, 1
          %s269 = smul.addr %s268, 16
          %s270 = scalar_lea.vmem [#allocation7], %s269
          %s272 = ssub.s32 256, 256
          %273 = vsyncadd %s267, %s272
          %s274 = smul.addr %s23, 2
          %s275 = smul.addr %s274, 128
          %s276 = scalar_lea.hbm %s1, %s275
          %s277 = sshll.u32 %s270, 4
          %s278 = int_to_ptr.vmem [resolvable:$true] %s277
          %283 = dma.hbm_to_vmem [thread:$0]  %s276, 256, %s278, %s267, 128, 128, 8
        $region36: #{tpu_custom_call.1} parent=27 // pred_fallthru
          _
        // Predicated region
        $region37: #{tpu_custom_call.1} parent=27 // pred_check
          %p284 = pneg %p95
        $region38: #{tpu_custom_call.1} parent=27 // pred_check_branch
          %286 = sbr.rel (%p284) target = $region40
        $region39: #{tpu_custom_call.1} parent=27 // pred_region
          %s287 = sand.u32 %s23, 1
          %s288 = scalar_lea.sflag [#allocation8], %s287
          %s289 = sand.u32 %s85, 1
          %s290 = smul.addr %s289, 16
          %s291 = scalar_lea.vmem [#allocation9], %s290
          %s293 = ssub.s32 256, 256
          %294 = vsyncadd %s288, %s293
          %s295 = smul.addr %s23, 2
          %s296 = smul.addr %s295, 128
          %s297 = scalar_lea.hbm %s2, %s296
          %s298 = sshll.u32 %s291, 4
          %s299 = int_to_ptr.vmem [resolvable:$true] %s298
          %304 = dma.hbm_to_vmem [thread:$0]  %s297, 256, %s299, %s288, 128, 128, 8
        $region40: #{tpu_custom_call.1} parent=27 // pred_fallthru
          _
      $region28: #{tpu_custom_call.1} parent=5 // pred_fallthru
        _
      %p305 = scmp.le.s32.totalorder 1, %s23
      %p306 = scmp.lt.s32.totalorder %s23, 3
      %p307 = pnand %p305, %p306
      %p308 = pneg %p307
      // Predicated region
      $region41: #{tpu_custom_call.1} parent=5 // pred_check
        _
      $region42: #{tpu_custom_call.1} parent=5 // pred_check_branch
        %310 = sbr.rel (%p307) target = $region44
      $region43: #{tpu_custom_call.1} parent=5 // pred_region
        %s311 = ssub.s32 %s23, 1
        %s312 = sand.u32 %s36, 1
        %s313 = scalar_lea.sflag [#allocation4], %s312
        %s314 = sand.u32 %s36, 1
        %s315 = smul.addr %s314, 16
        %s316 = scalar_lea.vmem [#allocation3], %s315
        // Predicated region
        $region45: #{tpu_custom_call.1} parent=43 // pred_check
          %p317 = pneg %p49
        $region46: #{tpu_custom_call.1} parent=43 // pred_check_branch
          %319 = sbr.rel (%p317) target = $region48
        $region47: #{tpu_custom_call.1} parent=43 // pred_region
          %320 = dma.done %s313, 256
        $region48: #{tpu_custom_call.1} parent=43 // pred_fallthru
          _
        %s321 = sand.u32 %s28, 1
        %s322 = scalar_lea.sflag [#allocation8], %s321
        %s323 = sand.u32 %s62, 1
        %s324 = smul.addr %s323, 16
        %s325 = scalar_lea.vmem [#allocation7], %s324
        // Predicated region
        $region49: #{tpu_custom_call.1} parent=43 // pred_check
          %p326 = pneg %p75
        $region50: #{tpu_custom_call.1} parent=43 // pred_check_branch
          %328 = sbr.rel (%p326) target = $region52
        $region51: #{tpu_custom_call.1} parent=43 // pred_region
          %329 = dma.done %s322, 256
        $region52: #{tpu_custom_call.1} parent=43 // pred_fallthru
          _
        %s330 = sand.u32 %s28, 1
        %s331 = scalar_lea.sflag [#allocation8], %s330
        %s332 = sand.u32 %s88, 1
        %s333 = smul.addr %s332, 16
        %s334 = scalar_lea.vmem [#allocation9], %s333
        // Predicated region
        $region53: #{tpu_custom_call.1} parent=43 // pred_check
          %p335 = pneg %p101
        $region54: #{tpu_custom_call.1} parent=43 // pred_check_branch
          %337 = sbr.rel (%p335) target = $region56
        $region55: #{tpu_custom_call.1} parent=43 // pred_region
          %338 = dma.done %s331, 256
        $region56: #{tpu_custom_call.1} parent=43 // pred_fallthru
          _
        // Predicated region
        $region57: #{tpu_custom_call.1} parent=43 // pred_check
          %p339 = pneg %p122
        $region58: #{tpu_custom_call.1} parent=43 // pred_check_branch
          %341 = sbr.rel (%p339) target = $region60
        $region59: #{tpu_custom_call.1} parent=43 // pred_region
          %342 = dma.done [#allocation6], 16
        $region60: #{tpu_custom_call.1} parent=43 // pred_fallthru
          _
        // Predicated region
        $region61: #{tpu_custom_call.1} parent=43 // pred_check
          %p343 = pneg %p143
        $region62: #{tpu_custom_call.1} parent=43 // pred_check_branch
          %345 = sbr.rel (%p343) target = $region64
        $region63: #{tpu_custom_call.1} parent=43 // pred_region
          %346 = dma.done [#allocation12], 16
        $region64: #{tpu_custom_call.1} parent=43 // pred_fallthru
          _
        // Predicated region
        $region65: #{tpu_custom_call.1} parent=43 // pred_check
          %p347 = pneg %p164
        $region66: #{tpu_custom_call.1} parent=43 // pred_check_branch
          %349 = sbr.rel (%p347) target = $region68
        $region67: #{tpu_custom_call.1} parent=43 // pred_region
          %350 = dma.done [#allocation12], 16
        $region68: #{tpu_custom_call.1} parent=43 // pred_fallthru
          _
        %351 = sfence
        %s352 = sand.u32 %s36, 1
        %s353 = scalar_lea.sflag [#allocation4], %s352
        %s354 = sand.u32 %s36, 1
        %s355 = smul.addr %s354, 16
        %s356 = scalar_lea.vmem [#allocation3], %s355
        %p357 = pneg %p49
        %p358 = pneg %p46
        %s359 = sand.u32 %s28, 1
        %s360 = scalar_lea.sflag [#allocation8], %s359
        %s361 = sand.u32 %s62, 1
        %s362 = smul.addr %s361, 16
        %s363 = scalar_lea.vmem [#allocation7], %s362
        %p364 = pneg %p75
        %p365 = pneg %p72
        %s366 = sand.u32 %s28, 1
        %s367 = scalar_lea.sflag [#allocation8], %s366
        %s368 = sand.u32 %s88, 1
        %s369 = smul.addr %s368, 16
        %s370 = scalar_lea.vmem [#allocation9], %s369
        %p371 = pneg %p101
        %p372 = pneg %p98
        %p373 = pneg %p122
        %p374 = pneg %p119
        %p375 = pneg %p143
        %p376 = pneg %p140
        %p377 = pneg %p164
        %p378 = pneg %p161
        %p379 = pneg %p190
        %p380 = pneg %p187
        %s381 = sand.u32 %s177, 1
        %s382 = scalar_lea.sflag [#allocation5], %s381
        %s383 = sand.u32 %s177, 1
        %s384 = smul.addr %s383, 48
        %s385 = scalar_lea.vmem [#allocation14], %s384
        %v386 = vld [vmem:[%s325] sm:$0xff]
        %v387 = vld [vmem:[%s325 + $0x8] sm:$0xff]
        %388 = vst [vmem:[#allocation2] sm:$0xff] 0.0
        %vm389 = vcmask 15360
        %390 = vst.msk [vmem:[#allocation2 + $0x8] sm:$0xff] %vm389, 0.0
        %391 = vst [vmem:[#allocation2 + $0x10] sm:$0xff] 0.0
        %392 = vst.msk [vmem:[#allocation2 + $0x18] sm:$0xff] %vm389, 0.0
        %393 = vst [vmem:[#allocation2 + $0x20] sm:$0x3] 0.0
        %vm394 = vcmask 9216
        %395 = vst.msk [vmem:[#allocation2 + $0x28] sm:$0x3] %vm394, 0.0
        %s396 = sld [smem:[#allocation13]]
        %v397 = vld [vmem:[%s316] sm:$0xff]
        %v398 = vld [vmem:[%s316 + $0x8] sm:$0xff]
        %vm401 = vcmask 1040384
        %v402 = vrot.slane %v397, 7
        %v403 = vrot.slane %v398, 7
        %v404 = vsel %vm401, %v402, %v403
        %405 = vrot.lane.b32.xlu0 %v402, 1
        %v406 = vpop.permute.xlu0 %405
        %407 = vrot.lane.b32.xlu0 %v404, 1
        %v408 = vpop.permute.xlu0 %407
        %409 = vrot.lane.b32.xlu0 %v403, 1
        %v410 = vpop.permute.xlu0 %409
        %vm414 = vcmask 1047561
        %415 = vst.msk [vmem:[#allocation2] sm:$0xfe] %vm414, %v406
        %vm416 = vcmask 7169
        %417 = vst.msk [vmem:[#allocation2 + $0x8] sm:$0xfe] %vm416, %v406
        %vm418 = vcmask 1047560
        %419 = vst.msk [vmem:[#allocation2 + $0x10] sm:$0xff] %vm418, %v408
        %vm420 = vcmask 7168
        %421 = vst.msk [vmem:[#allocation2 + $0x18] sm:$0xff] %vm420, %v408
        %vm422 = vcmask 1040392
        %423 = vst.msk [vmem:[#allocation2 + $0x20] sm:$0x1] %vm422, %v410
        %vm424 = vcmask 0
        %425 = vst.msk [vmem:[#allocation2 + $0x28] sm:$0x1] %vm424, %v410
        %v426 = vld [vmem:[#allocation2] sm:$0xff]
        %v427 = vld [vmem:[#allocation2 + $0x8] sm:$0xff]
        %v428 = vld [vmem:[#allocation2 + $0x10] sm:$0xff]
        %v429 = vld [vmem:[#allocation2 + $0x18] sm:$0xff]
        %v430 = vld [vmem:[#allocation2 + $0x20] sm:$0x3]
        %v431 = vld [vmem:[#allocation2 + $0x28] sm:$0x3]
        %v432 = vstv %s396
        %v433 = vadd.f32 %v432, 0.0
        %s434 = sld [smem:[#allocation10]]
        %v435 = vstv %s434
        %v436 = vmul.f32 %v435, %v426
        %v437 = vmul.f32 %v435, %v428
        %v438 = vadd.f32 %v433, %v436
        %v439 = vadd.f32 %v433, %v437
        %s440 = sld [smem:[#allocation10 + $0x3]]
        %v441 = vstv %s440
        %v442 = vmul.f32 %v441, %v426
        %v443 = vmul.f32 %v441, %v428
        %v444 = vmul.f32 %v441, %v430
        %vm448 = vcmask 1046528
        %v449 = vrot.slane %v442, 1
        %v450 = vrot.slane %v443, 1
        %v451 = vsel %vm448, %v449, %v450
        %v452 = vrot.slane %v444, 1
        %v453 = vsel %vm448, %v450, %v452
        %v456 = vadd.f32 %v438, %v451
        %v457 = vadd.f32 %v439, %v453
        %s458 = sld [smem:[#allocation10 + $0x6]]
        %v459 = vstv %s458
        %v460 = vmul.f32 %v459, %v426
        %v461 = vmul.f32 %v459, %v428
        %v462 = vmul.f32 %v459, %v430
        %vm466 = vcmask 1045504
        %v467 = vrot.slane %v460, 2
        %v468 = vrot.slane %v461, 2
        %v469 = vsel %vm466, %v467, %v468
        %v470 = vrot.slane %v462, 2
        %v471 = vsel %vm466, %v468, %v470
        %v474 = vadd.f32 %v456, %v469
        %v475 = vadd.f32 %v457, %v471
        %s476 = sld [smem:[#allocation10 + $0x1]]
        %v477 = vstv %s476
        %v478 = vmul.f32 %v477, %v426
        %v479 = vmul.f32 %v477, %v427
        %v480 = vmul.f32 %v477, %v428
        %v481 = vmul.f32 %v477, %v429
        %486 = vrot.lane.b32.xlu0 %v478, 127
        %v487 = vpop.permute.xlu0 %486
        %488 = vrot.lane.b32.xlu0 %v479, 127
        %v489 = vpop.permute.xlu0 %488
        %490 = vrot.lane.b32.xlu0 %v480, 127
        %v491 = vpop.permute.xlu0 %490
        %492 = vrot.lane.b32.xlu0 %v481, 127
        %v493 = vpop.permute.xlu0 %492
        %vm494 = vcmask 1039360
        %v495 = vsel %vm494, %v487, %v489
        %v496 = vsel %vm494, %v491, %v493
        %v499 = vadd.f32 %v474, %v495
        %v500 = vadd.f32 %v475, %v496
        %s501 = sld [smem:[#allocation10 + $0x4]]
        %v502 = vstv %s501
        %v503 = vmul.f32 %v502, %v426
        %v504 = vmul.f32 %v502, %v427
        %v505 = vmul.f32 %v502, %v428
        %v506 = vmul.f32 %v502, %v429
        %v507 = vmul.f32 %v502, %v430
        %v508 = vmul.f32 %v502, %v431
        %v515 = vrot.slane %v503, 1
        %v516 = vrot.slane %v505, 1
        %v517 = vsel %vm448, %v515, %v516
        %v518 = vrot.slane %v504, 1
        %v519 = vrot.slane %v506, 1
        %v520 = vsel %vm448, %v518, %v519
        %v521 = vrot.slane %v507, 1
        %v522 = vsel %vm448, %v516, %v521
        %v523 = vrot.slane %v508, 1
        %v524 = vsel %vm448, %v519, %v523
        %525 = vrot.lane.b32.xlu0 %v517, 127
        %v526 = vpop.permute.xlu0 %525
        %527 = vrot.lane.b32.xlu0 %v520, 127
        %v528 = vpop.permute.xlu0 %527
        %529 = vrot.lane.b32.xlu0 %v522, 127
        %v530 = vpop.permute.xlu0 %529
        %531 = vrot.lane.b32.xlu0 %v524, 127
        %v532 = vpop.permute.xlu0 %531
        %v533 = vsel %vm494, %v526, %v528
        %v534 = vsel %vm494, %v530, %v532
        %v537 = vadd.f32 %v499, %v533
        %v538 = vadd.f32 %v500, %v534
        %s539 = sld [smem:[#allocation10 + $0x7]]
        %v540 = vstv %s539
        %v541 = vmul.f32 %v540, %v426
        %v542 = vmul.f32 %v540, %v427
        %v543 = vmul.f32 %v540, %v428
        %v544 = vmul.f32 %v540, %v429
        %v545 = vmul.f32 %v540, %v430
        %v546 = vmul.f32 %v540, %v431
        %v553 = vrot.slane %v541, 2
        %v554 = vrot.slane %v543, 2
        %v555 = vsel %vm466, %v553, %v554
        %v556 = vrot.slane %v542, 2
        %v557 = vrot.slane %v544, 2
        %v558 = vsel %vm466, %v556, %v557
        %v559 = vrot.slane %v545, 2
        %v560 = vsel %vm466, %v554, %v559
        %v561 = vrot.slane %v546, 2
        %v562 = vsel %vm466, %v557, %v561
        %563 = vrot.lane.b32.xlu0 %v555, 127
        %v564 = vpop.permute.xlu0 %563
        %565 = vrot.lane.b32.xlu0 %v558, 127
        %v566 = vpop.permute.xlu0 %565
        %567 = vrot.lane.b32.xlu0 %v560, 127
        %v568 = vpop.permute.xlu0 %567
        %569 = vrot.lane.b32.xlu0 %v562, 127
        %v570 = vpop.permute.xlu0 %569
        %v571 = vsel %vm494, %v564, %v566
        %v572 = vsel %vm494, %v568, %v570
        %v575 = vadd.f32 %v537, %v571
        %v576 = vadd.f32 %v538, %v572
        %s577 = sld [smem:[#allocation10 + $0x2]]
        %v578 = vstv %s577
        %v579 = vmul.f32 %v578, %v426
        %v580 = vmul.f32 %v578, %v427
        %v581 = vmul.f32 %v578, %v428
        %v582 = vmul.f32 %v578, %v429
        %587 = vrot.lane.b32.xlu0 %v579, 126
        %v588 = vpop.permute.xlu0 %587
        %589 = vrot.lane.b32.xlu0 %v580, 126
        %v590 = vpop.permute.xlu0 %589
        %591 = vrot.lane.b32.xlu0 %v581, 126
        %v592 = vpop.permute.xlu0 %591
        %593 = vrot.lane.b32.xlu0 %v582, 126
        %v594 = vpop.permute.xlu0 %593
        %vm595 = vcmask 1031168
        %v596 = vsel %vm595, %v588, %v590
        %v597 = vsel %vm595, %v592, %v594
        %v600 = vadd.f32 %v575, %v596
        %v601 = vadd.f32 %v576, %v597
        %s602 = sld [smem:[#allocation10 + $0x5]]
        %v603 = vstv %s602
        %v604 = vmul.f32 %v603, %v426
        %v605 = vmul.f32 %v603, %v427
        %v606 = vmul.f32 %v603, %v428
        %v607 = vmul.f32 %v603, %v429
        %v608 = vmul.f32 %v603, %v430
        %v609 = vmul.f32 %v603, %v431
        %v616 = vrot.slane %v604, 1
        %v617 = vrot.slane %v606, 1
        %v618 = vsel %vm448, %v616, %v617
        %v619 = vrot.slane %v605, 1
        %v620 = vrot.slane %v607, 1
        %v621 = vsel %vm448, %v619, %v620
        %v622 = vrot.slane %v608, 1
        %v623 = vsel %vm448, %v617, %v622
        %v624 = vrot.slane %v609, 1
        %v625 = vsel %vm448, %v620, %v624
        %626 = vrot.lane.b32.xlu0 %v618, 126
        %v627 = vpop.permute.xlu0 %626
        %628 = vrot.lane.b32.xlu0 %v621, 126
        %v629 = vpop.permute.xlu0 %628
        %630 = vrot.lane.b32.xlu0 %v623, 126
        %v631 = vpop.permute.xlu0 %630
        %632 = vrot.lane.b32.xlu0 %v625, 126
        %v633 = vpop.permute.xlu0 %632
        %v634 = vsel %vm595, %v627, %v629
        %v635 = vsel %vm595, %v631, %v633
        %v638 = vadd.f32 %v600, %v634
        %v639 = vadd.f32 %v601, %v635
        %s640 = sld [smem:[#allocation10 + $0x8]]
        %v641 = vstv %s640
        %v642 = vmul.f32 %v641, %v426
        %v643 = vmul.f32 %v641, %v427
        %v644 = vmul.f32 %v641, %v428
        %v645 = vmul.f32 %v641, %v429
        %v646 = vmul.f32 %v641, %v430
        %v647 = vmul.f32 %v641, %v431
        %v654 = vrot.slane %v642, 2
        %v655 = vrot.slane %v644, 2
        %v656 = vsel %vm466, %v654, %v655
        %v657 = vrot.slane %v643, 2
        %v658 = vrot.slane %v645, 2
        %v659 = vsel %vm466, %v657, %v658
        %v660 = vrot.slane %v646, 2
        %v661 = vsel %vm466, %v655, %v660
        %v662 = vrot.slane %v647, 2
        %v663 = vsel %vm466, %v658, %v662
        %664 = vrot.lane.b32.xlu0 %v656, 126
        %v665 = vpop.permute.xlu0 %664
        %666 = vrot.lane.b32.xlu0 %v659, 126
        %v667 = vpop.permute.xlu0 %666
        %668 = vrot.lane.b32.xlu0 %v661, 126
        %v669 = vpop.permute.xlu0 %668
        %670 = vrot.lane.b32.xlu0 %v663, 126
        %v671 = vpop.permute.xlu0 %670
        %v672 = vsel %vm595, %v665, %v667
        %v673 = vsel %vm595, %v669, %v671
        %v676 = vadd.f32 %v638, %v672
        %v677 = vadd.f32 %v639, %v673
        %v678 = vmul.f32 %v676, %v386
        %v679 = vmul.f32 %v677, %v387
        %v680 = vadd.f32 %v678, %v386
        %v681 = vadd.f32 %v679, %v387
        %v682 = vxor.u32 %v680, 2147483648
        %v683 = vxor.u32 %v681, 2147483648
        %v684 = vmul.f32 %v682, 1.442695
        %v685 = vpow.pop %v684
        %v686 = vmul.f32 %v683, 1.442695
        %v687 = vpow.pop %v686
        %v688 = vadd.f32 %v685, 1.0
        %v689 = vadd.f32 %v687, 1.0
        %v690 = vrcp.pop %v688
        %v691 = vmul.f32 1.0, %v690
        %v692 = vrcp.pop %v689
        %v693 = vmul.f32 1.0, %v692
        %694 = vst [vmem:[%s385] sm:$0xff] %v691
        %695 = vst [vmem:[%s385 + $0x8] sm:$0xff] %v693
        %s696 = scalar_lea.vmem %s385, 16 [#allocation14]
        %697 = vst [vmem:[%s696] sm:$0xff] %v386
        %698 = vst [vmem:[%s696 + $0x8] sm:$0xff] %v387
        %s699 = sld [smem:[#allocation13 + $0x1]]
        %v700 = vld [vmem:[%s334] sm:$0xff]
        %v701 = vld [vmem:[%s334 + $0x8] sm:$0xff]
        %v704 = vrot.slane %v700, 7
        %v705 = vrot.slane %v701, 7
        %v706 = vsel %vm401, %v704, %v705
        %707 = vrot.lane.b32.xlu0 %v704, 1
        %v708 = vpop.permute.xlu0 %707
        %709 = vrot.lane.b32.xlu0 %v706, 1
        %v710 = vpop.permute.xlu0 %709
        %711 = vrot.lane.b32.xlu0 %v705, 1
        %v712 = vpop.permute.xlu0 %711
        %716 = vst.msk [vmem:[#allocation2] sm:$0xfe] %vm414, %v708
        %717 = vst.msk [vmem:[#allocation2 + $0x8] sm:$0xfe] %vm416, %v708
        %718 = vst.msk [vmem:[#allocation2 + $0x10] sm:$0xff] %vm418, %v710
        %719 = vst.msk [vmem:[#allocation2 + $0x18] sm:$0xff] %vm420, %v710
        %720 = vst.msk [vmem:[#allocation2 + $0x20] sm:$0x1] %vm422, %v712
        %721 = vst.msk [vmem:[#allocation2 + $0x28] sm:$0x1] %vm424, %v712
        %v722 = vld [vmem:[#allocation2] sm:$0xff]
        %v723 = vld [vmem:[#allocation2 + $0x8] sm:$0xff]
        %v724 = vld [vmem:[#allocation2 + $0x10] sm:$0xff]
        %v725 = vld [vmem:[#allocation2 + $0x18] sm:$0xff]
        %v726 = vld [vmem:[#allocation2 + $0x20] sm:$0x3]
        %v727 = vld [vmem:[#allocation2 + $0x28] sm:$0x3]
        %v728 = vstv %s699
        %v729 = vadd.f32 %v728, 0.0
        %s730 = sld [smem:[#allocation11]]
        %v731 = vstv %s730
        %v732 = vmul.f32 %v731, %v722
        %v733 = vmul.f32 %v731, %v724
        %v734 = vadd.f32 %v729, %v732
        %v735 = vadd.f32 %v729, %v733
        %s736 = sld [smem:[#allocation11 + $0x3]]
        %v737 = vstv %s736
        %v738 = vmul.f32 %v737, %v722
        %v739 = vmul.f32 %v737, %v724
        %v740 = vmul.f32 %v737, %v726
        %v744 = vrot.slane %v738, 1
        %v745 = vrot.slane %v739, 1
        %v746 = vsel %vm448, %v744, %v745
        %v747 = vrot.slane %v740, 1
        %v748 = vsel %vm448, %v745, %v747
        %v751 = vadd.f32 %v734, %v746
        %v752 = vadd.f32 %v735, %v748
        %s753 = sld [smem:[#allocation11 + $0x6]]
        %v754 = vstv %s753
        %v755 = vmul.f32 %v754, %v722
        %v756 = vmul.f32 %v754, %v724
        %v757 = vmul.f32 %v754, %v726
        %v761 = vrot.slane %v755, 2
        %v762 = vrot.slane %v756, 2
        %v763 = vsel %vm466, %v761, %v762
        %v764 = vrot.slane %v757, 2
        %v765 = vsel %vm466, %v762, %v764
        %v768 = vadd.f32 %v751, %v763
        %v769 = vadd.f32 %v752, %v765
        %s770 = sld [smem:[#allocation11 + $0x1]]
        %v771 = vstv %s770
        %v772 = vmul.f32 %v771, %v722
        %v773 = vmul.f32 %v771, %v723
        %v774 = vmul.f32 %v771, %v724
        %v775 = vmul.f32 %v771, %v725
        %780 = vrot.lane.b32.xlu0 %v772, 127
        %v781 = vpop.permute.xlu0 %780
        %782 = vrot.lane.b32.xlu0 %v773, 127
        %v783 = vpop.permute.xlu0 %782
        %784 = vrot.lane.b32.xlu0 %v774, 127
        %v785 = vpop.permute.xlu0 %784
        %786 = vrot.lane.b32.xlu0 %v775, 127
        %v787 = vpop.permute.xlu0 %786
        %v788 = vsel %vm494, %v781, %v783
        %v789 = vsel %vm494, %v785, %v787
        %v792 = vadd.f32 %v768, %v788
        %v793 = vadd.f32 %v769, %v789
        %s794 = sld [smem:[#allocation11 + $0x4]]
        %v795 = vstv %s794
        %v796 = vmul.f32 %v795, %v722
        %v797 = vmul.f32 %v795, %v723
        %v798 = vmul.f32 %v795, %v724
        %v799 = vmul.f32 %v795, %v725
        %v800 = vmul.f32 %v795, %v726
        %v801 = vmul.f32 %v795, %v727
        %v808 = vrot.slane %v796, 1
        %v809 = vrot.slane %v798, 1
        %v810 = vsel %vm448, %v808, %v809
        %v811 = vrot.slane %v797, 1
        %v812 = vrot.slane %v799, 1
        %v813 = vsel %vm448, %v811, %v812
        %v814 = vrot.slane %v800, 1
        %v815 = vsel %vm448, %v809, %v814
        %v816 = vrot.slane %v801, 1
        %v817 = vsel %vm448, %v812, %v816
        %818 = vrot.lane.b32.xlu0 %v810, 127
        %v819 = vpop.permute.xlu0 %818
        %820 = vrot.lane.b32.xlu0 %v813, 127
        %v821 = vpop.permute.xlu0 %820
        %822 = vrot.lane.b32.xlu0 %v815, 127
        %v823 = vpop.permute.xlu0 %822
        %824 = vrot.lane.b32.xlu0 %v817, 127
        %v825 = vpop.permute.xlu0 %824
        %v826 = vsel %vm494, %v819, %v821
        %v827 = vsel %vm494, %v823, %v825
        %v830 = vadd.f32 %v792, %v826
        %v831 = vadd.f32 %v793, %v827
        %s832 = sld [smem:[#allocation11 + $0x7]]
        %v833 = vstv %s832
        %v834 = vmul.f32 %v833, %v722
        %v835 = vmul.f32 %v833, %v723
        %v836 = vmul.f32 %v833, %v724
        %v837 = vmul.f32 %v833, %v725
        %v838 = vmul.f32 %v833, %v726
        %v839 = vmul.f32 %v833, %v727
        %v846 = vrot.slane %v834, 2
        %v847 = vrot.slane %v836, 2
        %v848 = vsel %vm466, %v846, %v847
        %v849 = vrot.slane %v835, 2
        %v850 = vrot.slane %v837, 2
        %v851 = vsel %vm466, %v849, %v850
        %v852 = vrot.slane %v838, 2
        %v853 = vsel %vm466, %v847, %v852
        %v854 = vrot.slane %v839, 2
        %v855 = vsel %vm466, %v850, %v854
        %856 = vrot.lane.b32.xlu0 %v848, 127
        %v857 = vpop.permute.xlu0 %856
        %858 = vrot.lane.b32.xlu0 %v851, 127
        %v859 = vpop.permute.xlu0 %858
        %860 = vrot.lane.b32.xlu0 %v853, 127
        %v861 = vpop.permute.xlu0 %860
        %862 = vrot.lane.b32.xlu0 %v855, 127
        %v863 = vpop.permute.xlu0 %862
        %v864 = vsel %vm494, %v857, %v859
        %v865 = vsel %vm494, %v861, %v863
        %v868 = vadd.f32 %v830, %v864
        %v869 = vadd.f32 %v831, %v865
        %s870 = sld [smem:[#allocation11 + $0x2]]
        %v871 = vstv %s870
        %v872 = vmul.f32 %v871, %v722
        %v873 = vmul.f32 %v871, %v723
        %v874 = vmul.f32 %v871, %v724
        %v875 = vmul.f32 %v871, %v725
        %880 = vrot.lane.b32.xlu0 %v872, 126
        %v881 = vpop.permute.xlu0 %880
        %882 = vrot.lane.b32.xlu0 %v873, 126
        %v883 = vpop.permute.xlu0 %882
        %884 = vrot.lane.b32.xlu0 %v874, 126
        %v885 = vpop.permute.xlu0 %884
        %886 = vrot.lane.b32.xlu0 %v875, 126
        %v887 = vpop.permute.xlu0 %886
        %v888 = vsel %vm595, %v881, %v883
        %v889 = vsel %vm595, %v885, %v887
        %v892 = vadd.f32 %v868, %v888
        %v893 = vadd.f32 %v869, %v889
        %s894 = sld [smem:[#allocation11 + $0x5]]
        %v895 = vstv %s894
        %v896 = vmul.f32 %v895, %v722
        %v897 = vmul.f32 %v895, %v723
        %v898 = vmul.f32 %v895, %v724
        %v899 = vmul.f32 %v895, %v725
        %v900 = vmul.f32 %v895, %v726
        %v901 = vmul.f32 %v895, %v727
        %v908 = vrot.slane %v896, 1
        %v909 = vrot.slane %v898, 1
        %v910 = vsel %vm448, %v908, %v909
        %v911 = vrot.slane %v897, 1
        %v912 = vrot.slane %v899, 1
        %v913 = vsel %vm448, %v911, %v912
        %v914 = vrot.slane %v900, 1
        %v915 = vsel %vm448, %v909, %v914
        %v916 = vrot.slane %v901, 1
        %v917 = vsel %vm448, %v912, %v916
        %918 = vrot.lane.b32.xlu0 %v910, 126
        %v919 = vpop.permute.xlu0 %918
        %920 = vrot.lane.b32.xlu0 %v913, 126
        %v921 = vpop.permute.xlu0 %920
        %922 = vrot.lane.b32.xlu0 %v915, 126
        %v923 = vpop.permute.xlu0 %922
        %924 = vrot.lane.b32.xlu0 %v917, 126
        %v925 = vpop.permute.xlu0 %924
        %v926 = vsel %vm595, %v919, %v921
        %v927 = vsel %vm595, %v923, %v925
        %v930 = vadd.f32 %v892, %v926
        %v931 = vadd.f32 %v893, %v927
        %s932 = sld [smem:[#allocation11 + $0x8]]
        %v933 = vstv %s932
        %v934 = vmul.f32 %v933, %v722
        %v935 = vmul.f32 %v933, %v723
        %v936 = vmul.f32 %v933, %v724
        %v937 = vmul.f32 %v933, %v725
        %v938 = vmul.f32 %v933, %v726
        %v939 = vmul.f32 %v933, %v727
        %v946 = vrot.slane %v934, 2
        %v947 = vrot.slane %v936, 2
        %v948 = vsel %vm466, %v946, %v947
        %v949 = vrot.slane %v935, 2
        %v950 = vrot.slane %v937, 2
        %v951 = vsel %vm466, %v949, %v950
        %v952 = vrot.slane %v938, 2
        %v953 = vsel %vm466, %v947, %v952
        %v954 = vrot.slane %v939, 2
        %v955 = vsel %vm466, %v950, %v954
        %956 = vrot.lane.b32.xlu0 %v948, 126
        %v957 = vpop.permute.xlu0 %956
        %958 = vrot.lane.b32.xlu0 %v951, 126
        %v959 = vpop.permute.xlu0 %958
        %960 = vrot.lane.b32.xlu0 %v953, 126
        %v961 = vpop.permute.xlu0 %960
        %962 = vrot.lane.b32.xlu0 %v955, 126
        %v963 = vpop.permute.xlu0 %962
        %v964 = vsel %vm595, %v957, %v959
        %v965 = vsel %vm595, %v961, %v963
        %v968 = vadd.f32 %v930, %v964
        %v969 = vadd.f32 %v931, %v965
        %v970 = vmul.f32 %v968, %v386
        %v971 = vmul.f32 %v969, %v387
        %v972 = vadd.f32 %v970, %v386
        %v973 = vadd.f32 %v971, %v387
        %v974 = vxor.u32 %v972, 2147483648
        %v975 = vxor.u32 %v973, 2147483648
        %v976 = vmul.f32 %v974, 1.442695
        %v977 = vpow.pop %v976
        %v978 = vmul.f32 %v975, 1.442695
        %v979 = vpow.pop %v978
        %v980 = vadd.f32 %v977, 1.0
        %v981 = vadd.f32 %v979, 1.0
        %v982 = vrcp.pop %v980
        %v983 = vmul.f32 1.0, %v982
        %v984 = vrcp.pop %v981
        %v985 = vmul.f32 1.0, %v984
        %s986 = scalar_lea.vmem %s385, 32 [#allocation14]
        %987 = vst [vmem:[%s986] sm:$0xff] %v983
        %988 = vst [vmem:[%s986 + $0x8] sm:$0xff] %v985
        %s989 = sand.u32 %s177, 1
        %s990 = scalar_lea.sflag [#allocation5], %s989
        %s991 = sand.u32 %s177, 1
        %s992 = smul.addr %s991, 48
        %s993 = scalar_lea.vmem [#allocation14], %s992
        // Predicated region
        $region69: #{tpu_custom_call.1} parent=43 // pred_check
          %p994 = pneg %p187
        $region70: #{tpu_custom_call.1} parent=43 // pred_check_branch
          %996 = sbr.rel (%p994) target = $region72
        $region71: #{tpu_custom_call.1} parent=43 // pred_region
          %s998 = ssub.s32 768, 768
          %999 = vsyncadd %s990, %s998
          %s1000 = smul.addr %s28, 6
          %s1001 = smul.addr %s1000, 128
          %s1002 = scalar_lea.hbm %s6, %s1001
          %s1003 = sshll.u32 %s993, 4
          %s1004 = int_to_ptr.vmem [resolvable:$true] %s1003
          %1009 = dma.vmem_to_hbm [thread:$0]  %s1004, 768, %s1002, %s990, 128, 128, 8
        $region72: #{tpu_custom_call.1} parent=43 // pred_fallthru
          _
      $region44: #{tpu_custom_call.1} parent=5 // pred_fallthru
        _
      %p1010 = scmp.le.s32.totalorder 2, %s23
      // Predicated region
      $region73: #{tpu_custom_call.1} parent=5 // pred_check
        %p1011 = pneg %p1010
      $region74: #{tpu_custom_call.1} parent=5 // pred_check_branch
        %1013 = sbr.rel (%p1011) target = $region76
      $region75: #{tpu_custom_call.1} parent=5 // pred_region
        %s1014 = ssub.s32 %s23, 2
        // Predicated region
        $region77: #{tpu_custom_call.1} parent=75 // pred_check
          %p1015 = pneg %p193
        $region78: #{tpu_custom_call.1} parent=75 // pred_check_branch
          %1017 = sbr.rel (%p1015) target = $region80
        $region79: #{tpu_custom_call.1} parent=75 // pred_region
          %s1018 = sand.u32 %s178, 1
          %s1019 = scalar_lea.sflag [#allocation5], %s1018
          %s1020 = sand.u32 %s178, 1
          %s1021 = smul.addr %s1020, 48
          %s1022 = scalar_lea.vmem [#allocation14], %s1021
          %1023 = dma.done %s1019, 768
        $region80: #{tpu_custom_call.1} parent=75 // pred_fallthru
          _
      $region76: #{tpu_custom_call.1} parent=5 // pred_fallthru
        _
    $region6: #{tpu_custom_call.1} parent=1 // loop_footer
      %s27 = sadd.s32 1, %s23
    $region7: #{tpu_custom_call.1} parent=1 // loop_footer_branch
      %22 = sbr.rel target = $region3
    $region8: #{tpu_custom_call.1} parent=1 // loop_exit
      _
    %1024 = vsyncpa [#allocation4], 1
    %s1025 = scalar_lea.sflag [#allocation4], 1
    %1026 = vsyncpa %s1025, 1
    %1027 = vsyncpa [#allocation8], 1
    %s1028 = scalar_lea.sflag [#allocation8], 1
    %1029 = vsyncpa %s1028, 1
    %1030 = vsyncpa [#allocation5], 1
    %s1031 = scalar_lea.sflag [#allocation5], 1
    %1032 = vsyncpa %s1031, 1
    %1033 = vsyncpa [#allocation6], 1
    %s1034 = scalar_lea.sflag [#allocation6], 1
    %1035 = vsyncpa %s1034, 1
    %1036 = vsyncpa [#allocation12], 1

</llo_original>
